<compile_context>
chip_gen: v6e
topology: v6e:2x2x1
jax: 0.10.0
libtpu: 0.0.40
codegen_flags: <defaults>
</compile_context>

<pallas_src>
import functools

import jax
import jax.numpy as jnp
from jax.experimental import pallas as pl
from jax.experimental.pallas import tpu as pltpu


def _round_up(x, m):
    return (x + m - 1) // m * m


# ----------------------------- kernel bodies -----------------------------

def _embed_tail(eps, n_type, n_vord, wz, td, ag, tok, vor, vsg,
                wta_ref, tparams_ref, type_tbl_ref, consts_ref, out_ref):
    """Shared tail: sin time/age embeds, linear+tanh, type adds, LayerNorm."""
    tm = wz.shape[0]

    # --- sinusoidal time-delta / age embeddings fused into one (tm, 2T) tile
    tp = tparams_ref[...]                               # (2, 2T) f32
    two_t = tp.shape[1]
    t_sz = two_t // 2
    lane = jax.lax.broadcasted_iota(jnp.int32, (tm, two_t), 1)
    s = jnp.where(lane < t_sz, td, ag)                  # (tm, 2T)
    tea = jnp.sin(s * tp[0:1, :] + tp[1:2, :])          # f32, [te | ae]

    # --- concat-linear (split matmuls, f32 accumulate) + bias + tanh
    z = wz + jnp.dot(tea.astype(wta_ref.dtype), wta_ref[...],
                     preferred_element_type=jnp.float32)
    consts = consts_ref[...]                            # (3, H) = [bias; gamma; beta]
    z = jnp.tanh(z + consts[0:1, :])

    # --- token-type / visit-order / visit-segment adds: one multi-hot matmul
    vtot = type_tbl_ref.shape[0]
    col = jax.lax.broadcasted_iota(jnp.int32, (tm, vtot), 1)
    mh = ((col == tok) | (col == vor + n_type)
          | (col == vsg + (n_type + n_vord)))
    mh = mh.astype(jnp.float32).astype(type_tbl_ref.dtype)
    e = z + jnp.dot(mh, type_tbl_ref[...], preferred_element_type=jnp.float32)

    # TODO(synk): nn.Dropout omitted (identity in eval mode).

    # --- LayerNorm (two-pass, f32) + affine
    mean = jnp.mean(e, axis=-1, keepdims=True)
    d = e - mean
    var = jnp.mean(d * d, axis=-1, keepdims=True)
    y = d * jax.lax.rsqrt(var + eps)
    out_ref[...] = (y * consts[1:2, :] + consts[2:3, :]).astype(out_ref.dtype)


def _cehr_kernel_resident(eps, n_type, n_vord,
                          packed_ref, wtab_ref, wta_ref, tparams_ref,
                          type_tbl_ref, consts_ref, out_ref):
    """Small-vocab path: (word_emb @ Ww) table is VMEM-resident; the gather
    is fused into a one-hot MXU matmul, so no (N, H) gather hits HBM."""
    packed_f = packed_ref[...]                          # (tm, 8) f32
    packed_i = pltpu.bitcast(packed_f, jnp.int32)       # int ids bitcast back
    td = packed_f[:, 0:1]
    ag = packed_f[:, 1:2]
    wid = packed_i[:, 2:3]
    tok = packed_i[:, 3:4]
    vor = packed_i[:, 4:5]
    vsg = packed_i[:, 5:6]

    tm = packed_f.shape[0]
    vpad = wtab_ref.shape[0]
    col = jax.lax.broadcasted_iota(jnp.int32, (tm, vpad), 1)
    onehot = (col == wid).astype(jnp.float32).astype(wtab_ref.dtype)
    wz = jnp.dot(onehot, wtab_ref[...], preferred_element_type=jnp.float32)

    _embed_tail(eps, n_type, n_vord, wz, td, ag, tok, vor, vsg,
                wta_ref, tparams_ref, type_tbl_ref, consts_ref, out_ref)


def _cehr_kernel_streamed(eps, n_type, n_vord,
                          packed_ref, word_ref, ww_ref, wta_ref, tparams_ref,
                          type_tbl_ref, consts_ref, out_ref):
    """Large-vocab fallback: pre-gathered word rows streamed (bf16) from HBM."""
    packed_f = packed_ref[...]
    packed_i = pltpu.bitcast(packed_f, jnp.int32)
    td = packed_f[:, 0:1]
    ag = packed_f[:, 1:2]
    tok = packed_i[:, 3:4]
    vor = packed_i[:, 4:5]
    vsg = packed_i[:, 5:6]

    wz = jnp.dot(word_ref[...], ww_ref[...], preferred_element_type=jnp.float32)

    _embed_tail(eps, n_type, n_vord, wz, td, ag, tok, vor, vsg,
                wta_ref, tparams_ref, type_tbl_ref, consts_ref, out_ref)


# ----------------------------- wrapper -----------------------------

def cehr_embeddings_forward(params, input_ids, time_stamps, ages,
                            token_type_ids, visit_orders, visit_segments,
                            *, layer_norm_eps=1e-12, tile_m=1024,
                            stream_dtype=jnp.bfloat16, out_dtype=jnp.float32,
                            resident_vocab_bytes=4 * 1024 * 1024):
    """MambaEmbeddingsForCEHR forward.

    input_ids / token_type_ids / visit_orders / visit_segments : (B, S) int
    time_stamps / ages : (B, S) float
    returns : (B, S, H) out_dtype
    """
    B, S = input_ids.shape
    H = params["word_emb"].shape[1]
    T = params["w_time"].shape[1]
    vocab = params["word_emb"].shape[0]
    N = B * S
    sb = jnp.dtype(stream_dtype).itemsize
    ob = jnp.dtype(out_dtype).itemsize

    # ----- tile sizing: big lane-dense row tiles, no over-padding for small N,
    #       >= 2 grid steps for big N (v7x has 2 TensorCores) -----
    tile_m = max(8, (int(tile_m) // 8) * 8)
    tile_m = min(tile_m, _round_up(N, 8))
    if N >= 1024:
        tile_m = min(tile_m, _round_up((N + 1) // 2, 8))
    n_pad = _round_up(N, tile_m)
    grid = (n_pad // tile_m,)

    def flat_pad(x, dtype):
        v = x.reshape(N).astype(dtype)
        if n_pad != N:
            v = jnp.pad(v, (0, n_pad - N))   # cheap: only small 1-D vectors padded
        return v

    # ----- glue (plain JAX): time-delta shift + tiny per-token packing -----
    ts = time_stamps.astype(jnp.float32)
    # is_time_delta=True: delta_0 = 0, delta_i = t_i - t_{i-1}
    tdelta = jnp.concatenate([ts[:, 0:1] * 0.0, ts[:, 1:] - ts[:, :-1]], axis=-1)

    def as_f32_bits(x):
        return jax.lax.bitcast_convert_type(x, jnp.float32)

    ids_flat = flat_pad(input_ids, jnp.int32)
    cols = [
        flat_pad(tdelta, jnp.float32),                       # 0: time delta
        flat_pad(ages, jnp.float32),                         # 1: age
        as_f32_bits(ids_flat),                               # 2: word id (bits)
        as_f32_bits(flat_pad(token_type_ids, jnp.int32)),    # 3: token type (bits)
        as_f32_bits(flat_pad(visit_orders, jnp.int32)),      # 4: visit order (bits)
        as_f32_bits(flat_pad(visit_segments, jnp.int32)),    # 5: visit segment (bits)
        jnp.zeros((n_pad,), jnp.float32),
        jnp.zeros((n_pad,), jnp.float32),
    ]
    packed = jnp.stack(cols, axis=-1)                        # (n_pad, 8) f32

    # ----- small, VMEM-resident parameter packs -----
    Wta = jnp.concatenate([params["Wt"], params["Wa"]], axis=0).astype(stream_dtype)
    tparams = jnp.concatenate(
        [jnp.concatenate([params["w_time"], params["w_age"]], axis=1),
         jnp.concatenate([params["phi_time"], params["phi_age"]], axis=1)],
        axis=0).astype(jnp.float32)                          # (2, 2T)
    n_type = params["token_type_emb"].shape[0]
    n_vord = params["visit_order_emb"].shape[0]
    type_tbl = jnp.concatenate([params["token_type_emb"],
                                params["visit_order_emb"],
                                params["visit_segment_emb"]], axis=0)
    vtot = type_tbl.shape[0]
    vtot_pad = _round_up(vtot, 8)
    if vtot_pad != vtot:
        type_tbl = jnp.pad(type_tbl, ((0, vtot_pad - vtot), (0, 0)))
    type_tbl = type_tbl.astype(stream_dtype)
    consts = jnp.concatenate([params["bias"], params["gamma"], params["beta"]],
                             axis=0).astype(jnp.float32)     # (3, H)

    row8 = pl.BlockSpec((tile_m, 8), lambda i: (i, 0))
    row_h = pl.BlockSpec((tile_m, H), lambda i: (i, 0))

    def full(shape):
        return pl.BlockSpec(shape, lambda i: (0, 0))

    vpad = _round_up(vocab, 128)
    resident = (vpad * H * sb <= resident_vocab_bytes) and (vpad <= 2048)

    if resident:
        # Fold word_emb @ Ww once (mathematically identical to gather-then-mul);
        # the in-kernel one-hot matmul then directly yields the word term.
        wtab = (params["word_emb"].astype(jnp.float32)
                @ params["Ww"].astype(jnp.float32))
        if vpad != vocab:
            wtab = jnp.pad(wtab, ((0, vpad - vocab), (0, 0)))
        wtab = wtab.astype(stream_dtype)
        kernel = functools.partial(_cehr_kernel_resident, layer_norm_eps,
                                   n_type, n_vord)
        operands = (packed, wtab, Wta, tparams, type_tbl, consts)
        in_specs = [row8, full((vpad, H)), full((2 * T, H)), full((2, 2 * T)),
                    full((vtot_pad, H)), full((3, H))]
        const_bytes = (vpad + 2 * T + vtot_pad) * H * sb
        interm = tile_m * (vpad + 2 * T + vtot_pad + 6 * H) * 4
    else:
        # Fallback: gather word rows once in XLA, stream them (bf16) to the kernel.
        word_rows = params["word_emb"][ids_flat].astype(stream_dtype)  # (n_pad, H)
        Ww = params["Ww"].astype(stream_dtype)
        kernel = functools.partial(_cehr_kernel_streamed, layer_norm_eps,
                                   n_type, n_vord)
        operands = (packed, word_rows, Ww, Wta, tparams, type_tbl, consts)
        in_specs = [row8, row_h, full((H, H)), full((2 * T, H)),
                    full((2, 2 * T)), full((vtot_pad, H)), full((3, H))]
        const_bytes = (H + 2 * T + vtot_pad) * H * sb
        interm = tile_m * (2 * T + vtot_pad + 6 * H) * 4 + tile_m * H * sb * 2

    # Scoped-VMEM budget from the actual working set (v7x only has 64 MiB/TC).
    step_bytes = tile_m * (128 * 4 + H * ob) * 2      # packed + out, double-buffered
    vmem_limit = int(min(48 * 1024 * 1024,
                         max(16 * 1024 * 1024,
                             1.5 * (const_bytes + step_bytes + interm))))

    out = pl.pallas_call(
        kernel,
        out_shape=jax.ShapeDtypeStruct((n_pad, H), out_dtype),
        grid_spec=pltpu.PrefetchScalarGridSpec(
            num_scalar_prefetch=0,
            grid=grid,
            in_specs=in_specs,
            out_specs=pl.BlockSpec((tile_m, H), lambda i: (i, 0)),
        ),
        compiler_params=pltpu.CompilerParams(
            dimension_semantics=("parallel",),
            vmem_limit_bytes=vmem_limit),
    )(*operands)

    if n_pad != N:
        out = out[:N]
    return out.reshape(B, S, H)


# ----------------------------- reference (plain JAX) -----------------------------

def cehr_embeddings_reference(params, input_ids, time_stamps, ages,
                              token_type_ids, visit_orders, visit_segments,
                              layer_norm_eps=1e-12):
    word_e = params["word_emb"][input_ids]
    tok_e = params["token_type_emb"][token_type_ids]
    vord_e = params["visit_order_emb"][visit_orders]
    vseg_e = params["visit_segment_emb"][visit_segments]
    ts = time_stamps.astype(jnp.float32)
    tdelta = jnp.concatenate([ts[:, 0:1] * 0.0, ts[:, 1:] - ts[:, :-1]], axis=-1)
    te = jnp.sin(tdelta[..., None] * params["w_time"][0] + params["phi_time"][0])
    ae = jnp.sin(ages.astype(jnp.float32)[..., None] * params["w_age"][0]
                 + params["phi_age"][0])
    cat = jnp.concatenate([word_e, te, ae], axis=-1)
    Wcat = jnp.concatenate([params["Ww"], params["Wt"], params["Wa"]], axis=0)
    z = jnp.tanh(cat @ Wcat + params["bias"][0])
    e = z + tok_e + vord_e + vseg_e
    mean = jnp.mean(e, axis=-1, keepdims=True)
    var = jnp.mean((e - mean) ** 2, axis=-1, keepdims=True)
    return (e - mean) * jax.lax.rsqrt(var + layer_norm_eps) * params["gamma"][0] \
        + params["beta"][0]


# ----------------------------- param init -----------------------------

def init_params(key, *, vocab_size, hidden_size, time_embeddings_size,
                type_vocab_size, max_num_visits, visit_order_size,
                pad_token_id=0):
    ks = jax.random.split(key, 12)
    H, T = hidden_size, time_embeddings_size
    word_emb = jax.random.normal(ks[0], (vocab_size, H), jnp.float32) * 0.02
    word_emb = word_emb.at[pad_token_id].set(0.0)  # padding_idx
    params = {
        "word_emb": word_emb,
        "token_type_emb": jax.random.normal(ks[1], (type_vocab_size, H)) * 0.02,
        "visit_order_emb": jax.random.normal(ks[2], (max_num_visits, H)) * 0.02,
        "visit_segment_emb": jax.random.normal(ks[3], (visit_order_size, H)) * 0.02,
        # scale_back_concat_layer: W^T split into [Ww; Wt; Wa] row blocks
        "Ww": jax.random.normal(ks[4], (H, H)) * (1.0 / jnp.sqrt(H + 2 * T)),
        "Wt": jax.random.normal(ks[5], (T, H)) * (1.0 / jnp.sqrt(H + 2 * T)),
        "Wa": jax.random.normal(ks[6], (T, H)) * (1.0 / jnp.sqrt(H + 2 * T)),
        "bias": jax.random.normal(ks[7], (1, H)) * 0.01,
        # TimeEmbeddingLayer params (xavier-uniform-ish scale)
        "w_time": jax.random.uniform(ks[8], (1, T), minval=-0.4, maxval=0.4),
        "phi_time": jax.random.uniform(ks[9], (1, T), minval=-0.4, maxval=0.4),
        "w_age": jax.random.uniform(ks[10], (1, T), minval=-0.4, maxval=0.4),
        "phi_age": jax.random.uniform(ks[11], (1, T), minval=-0.4, maxval=0.4),
        # LayerNorm
        "gamma": jnp.ones((1, H), jnp.float32),
        "beta": jnp.zeros((1, H), jnp.float32),
    }
    return jax.tree_util.tree_map(lambda x: x.astype(jnp.float32), params)


# ----------------------------- main -----------------------------

if __name__ == "__main__":
    key = jax.random.PRNGKey(0)

    B, S = 2, 8
    H = 128                 # config.hidden_size
    T = 32                  # time_embeddings_size
    VOCAB = 100
    TYPE_VOCAB = 9
    MAX_VISITS = 16
    VISIT_ORDER = 3

    pkey, k_ids, k_time, k_age, k_tt, k_vo, k_vs = jax.random.split(key, 7)
    params = init_params(pkey, vocab_size=VOCAB, hidden_size=H,
                         time_embeddings_size=T, type_vocab_size=TYPE_VOCAB,
                         max_num_visits=MAX_VISITS, visit_order_size=VISIT_ORDER)

    input_ids = jax.random.randint(k_ids, (B, S), 0, VOCAB, dtype=jnp.int32)
    time_stamps = jnp.cumsum(
        jax.random.uniform(k_time, (B, S), minval=0.0, maxval=5.0), axis=-1)
    ages = jax.random.uniform(k_age, (B, S), minval=20.0, maxval=80.0)
    token_type_ids = jax.random.randint(k_tt, (B, S), 0, TYPE_VOCAB, dtype=jnp.int32)
    visit_orders = jax.random.randint(k_vo, (B, S), 0, MAX_VISITS, dtype=jnp.int32)
    visit_segments = jax.random.randint(k_vs, (B, S), 0, VISIT_ORDER, dtype=jnp.int32)

    ref = jax.block_until_ready(
        cehr_embeddings_reference(params, input_ids, time_stamps, ages,
                                  token_type_ids, visit_orders, visit_segments))

    # Primary path: VMEM-resident folded word table, bf16 streams, jitted.
    fwd = jax.jit(cehr_embeddings_forward)
    out = jax.block_until_ready(
        fwd(params, input_ids, time_stamps, ages,
            token_type_ids, visit_orders, visit_segments))
    assert out.shape == (B, S, H)
    err = jnp.max(jnp.abs(out - ref))
    assert jnp.allclose(out, ref, atol=3e-2, rtol=3e-2), \
        f"resident path max abs err {err}"

    # Fallback path (forced): streamed bf16 word rows + in-kernel Ww matmul.
    out_s = jax.block_until_ready(
        cehr_embeddings_forward(params, input_ids, time_stamps, ages,
                                token_type_ids, visit_orders, visit_segments,
                                resident_vocab_bytes=0))
    err_s = jnp.max(jnp.abs(out_s - ref))
    assert jnp.allclose(out_s, ref, atol=3e-2, rtol=3e-2), \
        f"streamed path max abs err {err_s}"

    print("KERNEL_OK")
</pallas_src>

<mosaic_0001>
module attributes {stable_mosaic.version = 11 : i64} {
  func.func @_cehr_kernel_resident(%arg0: i32, %arg1: memref<16x8xf32, #tpu.memory_space<vmem>>, %arg2: memref<128x128xbf16, #tpu.memory_space<vmem>>, %arg3: memref<64x128xbf16, #tpu.memory_space<vmem>>, %arg4: memref<2x64xf32, #tpu.memory_space<vmem>>, %arg5: memref<32x128xbf16, #tpu.memory_space<vmem>>, %arg6: memref<3x128xf32, #tpu.memory_space<vmem>>, %arg7: memref<16x128xf32, #tpu.memory_space<vmem>>) attributes {dimension_semantics = [#tpu.dimension_semantics<parallel>], iteration_bounds = array<i64: 1>, scalar_prefetch = 0 : i64, scratch_operands = 0 : i64, tpu.core_type = #tpu.core_type<tc>, window_params = [{transform_indices = @transform_0, window_bounds = array<i64: 16, 8>}, {pipeline_mode = #tpu.pipeline_mode<synchronous>, transform_indices = @transform_1, window_bounds = array<i64: 128, 128>}, {pipeline_mode = #tpu.pipeline_mode<synchronous>, transform_indices = @transform_2, window_bounds = array<i64: 64, 128>}, {pipeline_mode = #tpu.pipeline_mode<synchronous>, transform_indices = @transform_3, window_bounds = array<i64: 2, 64>}, {pipeline_mode = #tpu.pipeline_mode<synchronous>, transform_indices = @transform_4, window_bounds = array<i64: 32, 128>}, {pipeline_mode = #tpu.pipeline_mode<synchronous>, transform_indices = @transform_5, window_bounds = array<i64: 3, 128>}, {transform_indices = @transform_6, window_bounds = array<i64: 16, 128>}]} {
    %c0 = arith.constant 0 : index
    %c0_0 = arith.constant 0 : index
    %0 = vector.load %arg1[%c0, %c0_0] : memref<16x8xf32, #tpu.memory_space<vmem>>, vector<16x8xf32>
    %1 = tpu.bitcast %0 : vector<16x8xf32> -> vector<16x8xi32>
    %2 = vector.extract_strided_slice %0 {offsets = [0, 0], sizes = [16, 1], strides = [1, 1]} : vector<16x8xf32> to vector<16x1xf32>
    %3 = vector.extract_strided_slice %0 {offsets = [0, 1], sizes = [16, 1], strides = [1, 1]} : vector<16x8xf32> to vector<16x1xf32>
    %4 = vector.extract_strided_slice %1 {offsets = [0, 2], sizes = [16, 1], strides = [1, 1]} : vector<16x8xi32> to vector<16x1xi32>
    %5 = vector.extract_strided_slice %1 {offsets = [0, 3], sizes = [16, 1], strides = [1, 1]} : vector<16x8xi32> to vector<16x1xi32>
    %6 = vector.extract_strided_slice %1 {offsets = [0, 4], sizes = [16, 1], strides = [1, 1]} : vector<16x8xi32> to vector<16x1xi32>
    %7 = vector.extract_strided_slice %1 {offsets = [0, 5], sizes = [16, 1], strides = [1, 1]} : vector<16x8xi32> to vector<16x1xi32>
    %8 = tpu.iota {dimensions = array<i32: 1>} : vector<16x128xi32>
    %9 = vector.broadcast %4 : vector<16x1xi32> to vector<16x128xi32>
    %10 = arith.cmpi eq, %8, %9 : vector<16x128xi32>
    %11 = arith.extui %10 : vector<16x128xi1> to vector<16x128xi32>
    %12 = arith.sitofp %11 : vector<16x128xi32> to vector<16x128xf32>
    %13 = arith.truncf %12 : vector<16x128xf32> to vector<16x128xbf16>
    %c0_1 = arith.constant 0 : index
    %c0_2 = arith.constant 0 : index
    %14 = vector.load %arg2[%c0_1, %c0_2] : memref<128x128xbf16, #tpu.memory_space<vmem>>, vector<128x128xbf16>
    %cst = arith.constant dense<0.000000e+00> : vector<16x128xf32>
    %15 = tpu.matmul %13, %14, %cst {dimension_numbers = #tpu.dot_dimension_numbers<[1], [0], [0], [1], [0, 0, 1, 1], [], []>} : vector<16x128xbf16>, vector<128x128xbf16>, vector<16x128xf32> -> vector<16x128xf32>
    %c0_3 = arith.constant 0 : index
    %c0_4 = arith.constant 0 : index
    %16 = vector.load %arg4[%c0_3, %c0_4] : memref<2x64xf32, #tpu.memory_space<vmem>>, vector<2x64xf32>
    %17 = tpu.iota {dimensions = array<i32: 1>} : vector<16x64xi32>
    %c32_i32 = arith.constant 32 : i32
    %18 = vector.broadcast %c32_i32 : i32 to vector<16x64xi32>
    %19 = arith.cmpi slt, %17, %18 : vector<16x64xi32>
    %20 = vector.shape_cast %2 : vector<16x1xf32> to vector<16x1xf32>
    %21 = vector.broadcast %20 : vector<16x1xf32> to vector<16x64xf32>
    %22 = vector.shape_cast %3 : vector<16x1xf32> to vector<16x1xf32>
    %23 = vector.broadcast %22 : vector<16x1xf32> to vector<16x64xf32>
    %24 = arith.select %19, %21, %23 : vector<16x64xi1>, vector<16x64xf32>
    %25 = vector.extract_strided_slice %16 {offsets = [0, 0], sizes = [1, 64], strides = [1, 1]} : vector<2x64xf32> to vector<1x64xf32>
    %26 = vector.broadcast %25 : vector<1x64xf32> to vector<16x64xf32>
    %27 = arith.mulf %24, %26 : vector<16x64xf32>
    %28 = vector.extract_strided_slice %16 {offsets = [1, 0], sizes = [1, 64], strides = [1, 1]} : vector<2x64xf32> to vector<1x64xf32>
    %29 = vector.broadcast %28 : vector<1x64xf32> to vector<16x64xf32>
    %30 = arith.addf %27, %29 : vector<16x64xf32>
    %31 = math.sin %30 : vector<16x64xf32>
    %32 = arith.truncf %31 : vector<16x64xf32> to vector<16x64xbf16>
    %c0_5 = arith.constant 0 : index
    %c0_6 = arith.constant 0 : index
    %33 = vector.load %arg3[%c0_5, %c0_6] : memref<64x128xbf16, #tpu.memory_space<vmem>>, vector<64x128xbf16>
    %cst_7 = arith.constant dense<0.000000e+00> : vector<16x128xf32>
    %34 = tpu.matmul %32, %33, %cst_7 {dimension_numbers = #tpu.dot_dimension_numbers<[1], [0], [0], [1], [0, 0, 1, 1], [], []>} : vector<16x64xbf16>, vector<64x128xbf16>, vector<16x128xf32> -> vector<16x128xf32>
    %35 = arith.addf %15, %34 : vector<16x128xf32>
    %c0_8 = arith.constant 0 : index
    %c0_9 = arith.constant 0 : index
    %36 = vector.load %arg6[%c0_8, %c0_9] : memref<3x128xf32, #tpu.memory_space<vmem>>, vector<3x128xf32>
    %37 = vector.extract_strided_slice %36 {offsets = [0, 0], sizes = [1, 128], strides = [1, 1]} : vector<3x128xf32> to vector<1x128xf32>
    %38 = vector.broadcast %37 : vector<1x128xf32> to vector<16x128xf32>
    %39 = arith.addf %35, %38 : vector<16x128xf32>
    %40 = math.tanh %39 : vector<16x128xf32>
    %41 = tpu.iota {dimensions = array<i32: 1>} : vector<16x32xi32>
    %42 = vector.broadcast %5 : vector<16x1xi32> to vector<16x32xi32>
    %43 = arith.cmpi eq, %41, %42 : vector<16x32xi32>
    %c9_i32 = arith.constant 9 : i32
    %44 = vector.broadcast %c9_i32 : i32 to vector<16x1xi32>
    %45 = arith.addi %6, %44 : vector<16x1xi32>
    %46 = vector.broadcast %45 : vector<16x1xi32> to vector<16x32xi32>
    %47 = arith.cmpi eq, %41, %46 : vector<16x32xi32>
    %48 = arith.ori %43, %47 : vector<16x32xi1>
    %c25_i32 = arith.constant 25 : i32
    %49 = vector.broadcast %c25_i32 : i32 to vector<16x1xi32>
    %50 = arith.addi %7, %49 : vector<16x1xi32>
    %51 = vector.broadcast %50 : vector<16x1xi32> to vector<16x32xi32>
    %52 = arith.cmpi eq, %41, %51 : vector<16x32xi32>
    %53 = arith.ori %48, %52 : vector<16x32xi1>
    %54 = arith.extui %53 : vector<16x32xi1> to vector<16x32xi32>
    %55 = arith.sitofp %54 : vector<16x32xi32> to vector<16x32xf32>
    %56 = arith.truncf %55 : vector<16x32xf32> to vector<16x32xbf16>
    %c0_10 = arith.constant 0 : index
    %c0_11 = arith.constant 0 : index
    %57 = vector.load %arg5[%c0_10, %c0_11] : memref<32x128xbf16, #tpu.memory_space<vmem>>, vector<32x128xbf16>
    %cst_12 = arith.constant dense<0.000000e+00> : vector<16x128xf32>
    %58 = tpu.matmul %56, %57, %cst_12 {dimension_numbers = #tpu.dot_dimension_numbers<[1], [0], [0], [1], [0, 0, 1, 1], [], []>} : vector<16x32xbf16>, vector<32x128xbf16>, vector<16x128xf32> -> vector<16x128xf32>
    %59 = arith.addf %40, %58 : vector<16x128xf32>
    %cst_13 = arith.constant dense<0.000000e+00> : vector<16xf32>
    %60 = vector.multi_reduction <add>, %59, %cst_13 [1] : vector<16x128xf32> to vector<16xf32>
    %61 = vector.shape_cast %60 : vector<16xf32> to vector<16x1xf32>
    %cst_14 = arith.constant 1.280000e+02 : f32
    %62 = vector.broadcast %cst_14 : f32 to vector<16x1xf32>
    %63 = arith.divf %61, %62 : vector<16x1xf32>
    %64 = vector.broadcast %63 : vector<16x1xf32> to vector<16x128xf32>
    %65 = arith.subf %59, %64 : vector<16x128xf32>
    %66 = arith.mulf %65, %65 : vector<16x128xf32>
    %cst_15 = arith.constant dense<0.000000e+00> : vector<16xf32>
    %67 = vector.multi_reduction <add>, %66, %cst_15 [1] : vector<16x128xf32> to vector<16xf32>
    %68 = vector.shape_cast %67 : vector<16xf32> to vector<16x1xf32>
    %cst_16 = arith.constant 1.280000e+02 : f32
    %69 = vector.broadcast %cst_16 : f32 to vector<16x1xf32>
    %70 = arith.divf %68, %69 : vector<16x1xf32>
    %cst_17 = arith.constant 9.99999996E-13 : f32
    %71 = vector.broadcast %cst_17 : f32 to vector<16x1xf32>
    %72 = arith.addf %70, %71 : vector<16x1xf32>
    %73 = math.rsqrt %72 : vector<16x1xf32>
    %74 = vector.broadcast %73 : vector<16x1xf32> to vector<16x128xf32>
    %75 = arith.mulf %65, %74 : vector<16x128xf32>
    %76 = vector.extract_strided_slice %36 {offsets = [1, 0], sizes = [1, 128], strides = [1, 1]} : vector<3x128xf32> to vector<1x128xf32>
    %77 = vector.broadcast %76 : vector<1x128xf32> to vector<16x128xf32>
    %78 = arith.mulf %75, %77 : vector<16x128xf32>
    %79 = vector.extract_strided_slice %36 {offsets = [2, 0], sizes = [1, 128], strides = [1, 1]} : vector<3x128xf32> to vector<1x128xf32>
    %80 = vector.broadcast %79 : vector<1x128xf32> to vector<16x128xf32>
    %81 = arith.addf %78, %80 : vector<16x128xf32>
    %c0_18 = arith.constant 0 : index
    %c0_19 = arith.constant 0 : index
    %82 = vector.load %arg7[%c0_18, %c0_19] : memref<16x128xf32, #tpu.memory_space<vmem>>, vector<16x128xf32>
    tpu.vector_store %arg7[%c0_18, %c0_19], %81 {strides = array<i32>} : memref<16x128xf32, #tpu.memory_space<vmem>>, vector<16x128xf32>,
    return
  }
  func.func @transform_0(%arg0: i32) -> (i32, i32) {
    %c0_i32 = arith.constant 0 : i32
    %c0_i32_0 = arith.constant 0 : i32
    return %arg0, %c0_i32 : i32, i32
  }
  func.func @transform_1(%arg0: i32) -> (i32, i32) {
    %c0_i32 = arith.constant 0 : i32
    %c0_i32_0 = arith.constant 0 : i32
    %c0_i32_1 = arith.constant 0 : i32
    return %c0_i32, %c0_i32_0 : i32, i32
  }
  func.func @transform_2(%arg0: i32) -> (i32, i32) {
    %c0_i32 = arith.constant 0 : i32
    %c0_i32_0 = arith.constant 0 : i32
    %c0_i32_1 = arith.constant 0 : i32
    return %c0_i32, %c0_i32_0 : i32, i32
  }
  func.func @transform_3(%arg0: i32) -> (i32, i32) {
    %c0_i32 = arith.constant 0 : i32
    %c0_i32_0 = arith.constant 0 : i32
    %c0_i32_1 = arith.constant 0 : i32
    return %c0_i32, %c0_i32_0 : i32, i32
  }
  func.func @transform_4(%arg0: i32) -> (i32, i32) {
    %c0_i32 = arith.constant 0 : i32
    %c0_i32_0 = arith.constant 0 : i32
    %c0_i32_1 = arith.constant 0 : i32
    return %c0_i32, %c0_i32_0 : i32, i32
  }
  func.func @transform_5(%arg0: i32) -> (i32, i32) {
    %c0_i32 = arith.constant 0 : i32
    %c0_i32_0 = arith.constant 0 : i32
    %c0_i32_1 = arith.constant 0 : i32
    return %c0_i32, %c0_i32_0 : i32, i32
  }
  func.func @transform_6(%arg0: i32) -> (i32, i32) {
    %c0_i32 = arith.constant 0 : i32
    %c0_i32_0 = arith.constant 0 : i32
    return %arg0, %c0_i32 : i32, i32
  }
}

</mosaic_0001>

<llo_original>
// kernel: cehr_embeddings_forward.1
$region0: #{cehr_embeddings_forward.1}
  #allocation0 [shape = 'u32[]', space=smem, size = 0x4, offset = 0x4, fixed_abs, tag = 'smem constant byte address 0x4 - core index']
  #allocation1 [shape = 'u32[144,128]{1,0:T(1,128)}', space=vmem, size = 0x12000, scoped, tag = 'internal scratch']
  %s0 = inlined_call_operand.vmem [shape: f32[16,8], index: 0, kind: input, shape index: {}]
  %s1 = inlined_call_operand.vmem [shape: bf16[128,128], index: 1, kind: input, shape index: {}]
  %s2 = inlined_call_operand.vmem [shape: bf16[64,128], index: 2, kind: input, shape index: {}]
  %s3 = inlined_call_operand.vmem [shape: f32[2,64], index: 3, kind: input, shape index: {}]
  %s4 = inlined_call_operand.vmem [shape: bf16[32,128], index: 4, kind: input, shape index: {}]
  %s5 = inlined_call_operand.vmem [shape: f32[3,128], index: 5, kind: input, shape index: {}]
  %s6 = inlined_call_operand.hbm [shape: f32[16,128], index: 6, kind: output, shape index: {}]
  %s7 = sld [smem:[#allocation0]]
  $region34: #{cehr_embeddings_forward.1} parent=0
    _
  %s9 = ssub.s32 1, %s7
  %s10 = scalar_select 0, %s9, %s7
  $region1: #{cehr_embeddings_forward.1} parent=0
    #allocation2 [shape = 'u8[8192]{0}', space=vmem, size = 0x2000, scoped, tag = 'output window, operand 0, single buffered']
    #allocation3 [shape = 's32[1]{0}', space=sflag, size = 0x4, scoped, tag = 'scoped memory for cehr_embeddings_forward.1']
    %11 = vsyncpa [#allocation3], 0
    // Predicated region
    $region2: #{cehr_embeddings_forward.1} parent=1 // pred_check
      _
    $region3: #{cehr_embeddings_forward.1} parent=1 // pred_check_branch
      %13 = sbr.rel (0) target = $region5
    $region4: #{cehr_embeddings_forward.1} parent=1 // pred_region
      _
    $region5: #{cehr_embeddings_forward.1} parent=1 // pred_fallthru
      _
    // Predicated region
    $region6: #{cehr_embeddings_forward.1} parent=1 // pred_check
      _
    $region7: #{cehr_embeddings_forward.1} parent=1 // pred_check_branch
      %15 = sbr.rel (0) target = $region9
    $region8: #{cehr_embeddings_forward.1} parent=1 // pred_region
      _
    $region9: #{cehr_embeddings_forward.1} parent=1 // pred_fallthru
      _
    // Predicated region
    $region10: #{cehr_embeddings_forward.1} parent=1 // pred_check
      _
    $region11: #{cehr_embeddings_forward.1} parent=1 // pred_check_branch
      %17 = sbr.rel (0) target = $region13
    $region12: #{cehr_embeddings_forward.1} parent=1 // pred_region
      _
    $region13: #{cehr_embeddings_forward.1} parent=1 // pred_fallthru
      _
    // Predicated region
    $region14: #{cehr_embeddings_forward.1} parent=1 // pred_check
      _
    $region15: #{cehr_embeddings_forward.1} parent=1 // pred_check_branch
      %19 = sbr.rel (0) target = $region17
    $region16: #{cehr_embeddings_forward.1} parent=1 // pred_region
      _
    $region17: #{cehr_embeddings_forward.1} parent=1 // pred_fallthru
      _
    // Predicated region
    $region18: #{cehr_embeddings_forward.1} parent=1 // pred_check
      _
    $region19: #{cehr_embeddings_forward.1} parent=1 // pred_check_branch
      %21 = sbr.rel (0) target = $region21
    $region20: #{cehr_embeddings_forward.1} parent=1 // pred_region
      _
    $region21: #{cehr_embeddings_forward.1} parent=1 // pred_fallthru
      _
    // Predicated region
    $region22: #{cehr_embeddings_forward.1} parent=1 // pred_check
      _
    $region23: #{cehr_embeddings_forward.1} parent=1 // pred_check_branch
      %23 = sbr.rel (0) target = $region25
    $region24: #{cehr_embeddings_forward.1} parent=1 // pred_region
      _
    $region25: #{cehr_embeddings_forward.1} parent=1 // pred_fallthru
      _
    %v25 = vld [vmem:[%s0] sm:$0xff]
    %v26 = vld [vmem:[%s0 + $0x8] sm:$0xff]
    %v29 = vlaneseq
    %v30 = vand.u32 %v29, 127
    %31 = vset.pattern.permute.xlu0 2
    %32 = vperm.xlu0 %31, %v25
    %v33 = vpop.permute.xlu0 %32
    %34 = vset.pattern.permute.xlu0 2
    %35 = vperm.xlu0 %34, %v26
    %v36 = vpop.permute.xlu0 %35
    %vm37 = vcmp.eq.s32.totalorder %v30, %v33
    %vm38 = vcmp.eq.s32.totalorder %v30, %v36
    %v39 = vsel %vm37, 1, 0
    %v40 = vsel %vm38, 1, 0
    %v41 = vcvt.s32.f32 %v39
    %v42 = vcvt.s32.f32 %v40
    %v43 = vpack.c.bf16 %v42, %v41
    %v44 = vld [vmem:[%s1] sm:$0xf]
    %v45 = vld [vmem:[%s1 + $0x4] sm:$0xf]
    %v46 = vld [vmem:[%s1 + $0x8] sm:$0xf]
    %v47 = vld [vmem:[%s1 + $0xc] sm:$0xf]
    %v48 = vld [vmem:[%s1 + $0x10] sm:$0xf]
    %v49 = vld [vmem:[%s1 + $0x14] sm:$0xf]
    %v50 = vld [vmem:[%s1 + $0x18] sm:$0xf]
    %v51 = vld [vmem:[%s1 + $0x1c] sm:$0xf]
    %v52 = vld [vmem:[%s1 + $0x20] sm:$0xf]
    %v53 = vld [vmem:[%s1 + $0x24] sm:$0xf]
    %v54 = vld [vmem:[%s1 + $0x28] sm:$0xf]
    %v55 = vld [vmem:[%s1 + $0x2c] sm:$0xf]
    %v56 = vld [vmem:[%s1 + $0x30] sm:$0xf]
    %v57 = vld [vmem:[%s1 + $0x34] sm:$0xf]
    %v58 = vld [vmem:[%s1 + $0x38] sm:$0xf]
    %v59 = vld [vmem:[%s1 + $0x3c] sm:$0xf]
    %v60 = vld [vmem:[%s3] sm:$0x3]
    %vm61 = vcmp.lt.s32.totalorder %v30, 32
    %62 = vset.pattern.permute.xlu0 0
    %63 = vperm.xlu0 %62, %v25
    %v64 = vpop.permute.xlu0 %63
    %66 = vset.pattern.permute.xlu0 0
    %67 = vperm.xlu0 %66, %v26
    %v68 = vpop.permute.xlu0 %67
    %70 = vset.pattern.permute.xlu0 1
    %71 = vperm.xlu0 %70, %v25
    %v72 = vpop.permute.xlu0 %71
    %74 = vset.pattern.permute.xlu0 1
    %75 = vperm.xlu0 %74, %v26
    %v76 = vpop.permute.xlu0 %75
    %v78 = vsel %vm61, %v64, %v72
    %v79 = vsel %vm61, %v68, %v76
    %v80 = vlaneseq
    %v81 = vshrl.u32 %v80, 7
    %v82 = vsub.s32 0, %v81
    %v83 = vrot.slane %v60, %v82
    %v84 = vmul.f32 %v78, %v83
    %v85 = vmul.f32 %v79, %v83
    %v86 = vlaneseq
    %v87 = vshrl.u32 %v86, 7
    %v88 = vsub.s32 1, %v87
    %v89 = vrot.slane %v60, %v88
    %v90 = vadd.f32 %v84, %v89
    %v91 = vadd.f32 %v85, %v89
    %v92 = vand.u32 2147483647, %v90
    %vm93 = vcmp.le.f32.partialorder %v92, 0.7853982
    %vm94 = vcmp.lt.s32.totalorder %v90, 0
    %v95 = vand.u32 %v90, 2139095040
    %v96 = vshrl.u32 %v95, 23
    %v97 = vsub.s32 %v96, 127
    %v98 = vand.u32 2147483647, %v90
    %v99 = vand.u32 %v98, 8388607
    %v100 = vor.u32 %v99, 8388608
    %v101 = vsub.s32 0, %v100
    %v102 = vadd.s32 %v97, 1
    %vm103 = vcmp.gt.s32.totalorder %v102, 0
    %v104 = vsel %vm103, %v102, 0
    %v105 = vshrl.u32 %v104, 5
    %v106 = vand.u32 %v104, 31
    %v107 = vsub.s32 32, %v106
    %v108 = vshrl.u32 683565275, %v107
    %v109 = vshll.u32 683565275, %v106
    %v110 = vshrl.u32 2475754826, %v107
    %v111 = vor.u32 %v109, %v110
    %v112 = vshll.u32 2475754826, %v106
    %v113 = vshrl.u32 2131351028, %v107
    %v114 = vor.u32 %v112, %v113
    %v115 = vshll.u32 2131351028, %v106
    %v116 = vshrl.u32 2102212464, %v107
    %v117 = vor.u32 %v115, %v116
    %v118 = vshll.u32 2102212464, %v106
    %v119 = vshrl.u32 920167782, %v107
    %v120 = vor.u32 %v118, %v119
    %v121 = vshll.u32 920167782, %v106
    %v122 = vshrl.u32 1326507024, %v107
    %v123 = vor.u32 %v121, %v122
    %vm124 = vcmp.lt.s32.totalorder %v105, 1
    %vm125 = vcmp.lt.s32.totalorder %v105, 2
    %vm126 = vcmp.lt.s32.totalorder %v105, 3
    %vm127 = vcmp.lt.s32.totalorder %v105, 4
    %v128 = vsel %vm124, %v108, %v111
    %v129 = vsel %vm127, %v117, 2102212464
    %v130 = vsel %vm126, %v114, %v129
    %v131 = vsel %vm125, %v128, %v130
    %v132 = vsel %vm124, %v111, %v114
    %v133 = vsel %vm127, %v120, 920167782
    %v134 = vsel %vm126, %v117, %v133
    %v135 = vsel %vm125, %v132, %v134
    %v136 = vsel %vm124, %v114, %v117
    %v137 = vsel %vm127, %v123, 1326507024
    %v138 = vsel %vm126, %v120, %v137
    %v139 = vsel %vm125, %v136, %v138
    %v140 = vshll.u32 %v100, 8
    %v141 = vmul.u32.u64.compose %v140, %v139
    %v142 = vextract.low.u32 %v141
    %v143 = vextract.high.u32 %v141
    %v144 = vmul.u32.u64.compose %v140, %v135
    %v145 = vextract.low.u32 %v144
    %v146 = vextract.high.u32 %v144
    %v147 = vmul.u32 %v140, %v131
    %v148 = vadd.s32 %v143, %v145
    %vm149 = vc.u32 %v143, %v145
    %v150 = vadd.s32 %v146, 1
    %v151 = vsel %vm149, %v150, %v146
    %v152 = vadd.s32 %v147, %v151
    %v153 = vadd.s32 %v152, 536870912
    %v154 = vshrl.u32 %v153, 30
    %v155 = vshll.u32 %v154, 30
    %v156 = vsub.s32 %v152, %v155
    %vm157 = vcmp.lt.s32.totalorder %v156, 0
    %v158 = vsub.s32 0, %v156
    %v159 = vsel %vm157, %v158, %v156
    %v160 = vclz %v159
    %v161 = vsub.s32 %v160, 2
    %vm162 = vcmp.gt.s32.totalorder 0, %v161
    %v163 = vsel %vm162, 0, %v161
    %v164 = vsub.s32 32, %v163
    %v165 = vshll.u32 %v156, %v163
    %v166 = vshrl.u32 %v148, %v164
    %v167 = vor.u32 %v165, %v166
    %v168 = vsub.s32 4294967266, %v163
    %v169 = vadd.s32 %v168, 127
    %v170 = vshll.u32 %v169, 23
    %v171 = vor.u32 4788187, %v170
    %v172 = vand.u32 2147483647, %v171
    %v174 = vcvt.s32.f32 %v167
    %v175 = vmul.f32 %v174, %v172
    %v176 = vxor.u32 %v175, 2147483648
    %v177 = vsel %vm94, %v176, %v175
    %v178 = vsub.s32 4, %v154
    %v179 = vsel %vm94, %v178, %v154
    %v180 = vsel %vm93, %v90, %v177
    %v181 = vsel %vm93, 0, %v179
    %v182 = vcosq.f32.pop %v180
    %v183 = vsinq.f32.pop %v180
    %vm184 = vweird.f32 %v90
    %v185 = vadd.s32 %v181, 3
    %v186 = vand.u32 %v185, 3
    %vm187 = vcmp.lt.s32.totalorder %v186, 2
    %vm188 = vcmp.eq.s32.totalorder %v186, 0
    %v189 = vxor.u32 %v183, 2147483648
    %v190 = vsel %vm188, %v182, %v189
    %vm191 = vcmp.eq.s32.totalorder %v186, 2
    %v192 = vxor.u32 %v182, 2147483648
    %v193 = vsel %vm191, %v192, %v183
    %v194 = vsel %vm187, %v190, %v193
    %v195 = vsel %vm184, nan, %v194
    %v196 = vand.u32 2147483647, %v91
    %vm197 = vcmp.le.f32.partialorder %v196, 0.7853982
    %vm198 = vcmp.lt.s32.totalorder %v91, 0
    %v199 = vand.u32 %v91, 2139095040
    %v200 = vshrl.u32 %v199, 23
    %v201 = vsub.s32 %v200, 127
    %v202 = vand.u32 2147483647, %v91
    %v203 = vand.u32 %v202, 8388607
    %v204 = vor.u32 %v203, 8388608
    %v205 = vsub.s32 0, %v204
    %v206 = vadd.s32 %v201, 1
    %vm207 = vcmp.gt.s32.totalorder %v206, 0
    %v208 = vsel %vm207, %v206, 0
    %v209 = vshrl.u32 %v208, 5
    %v210 = vand.u32 %v208, 31
    %v211 = vsub.s32 32, %v210
    %v212 = vshrl.u32 683565275, %v211
    %v213 = vshll.u32 683565275, %v210
    %v214 = vshrl.u32 2475754826, %v211
    %v215 = vor.u32 %v213, %v214
    %v216 = vshll.u32 2475754826, %v210
    %v217 = vshrl.u32 2131351028, %v211
    %v218 = vor.u32 %v216, %v217
    %v219 = vshll.u32 2131351028, %v210
    %v220 = vshrl.u32 2102212464, %v211
    %v221 = vor.u32 %v219, %v220
    %v222 = vshll.u32 2102212464, %v210
    %v223 = vshrl.u32 920167782, %v211
    %v224 = vor.u32 %v222, %v223
    %v225 = vshll.u32 920167782, %v210
    %v226 = vshrl.u32 1326507024, %v211
    %v227 = vor.u32 %v225, %v226
    %vm228 = vcmp.lt.s32.totalorder %v209, 1
    %vm229 = vcmp.lt.s32.totalorder %v209, 2
    %vm230 = vcmp.lt.s32.totalorder %v209, 3
    %vm231 = vcmp.lt.s32.totalorder %v209, 4
    %v232 = vsel %vm228, %v212, %v215
    %v233 = vsel %vm231, %v221, 2102212464
    %v234 = vsel %vm230, %v218, %v233
    %v235 = vsel %vm229, %v232, %v234
    %v236 = vsel %vm228, %v215, %v218
    %v237 = vsel %vm231, %v224, 920167782
    %v238 = vsel %vm230, %v221, %v237
    %v239 = vsel %vm229, %v236, %v238
    %v240 = vsel %vm228, %v218, %v221
    %v241 = vsel %vm231, %v227, 1326507024
    %v242 = vsel %vm230, %v224, %v241
    %v243 = vsel %vm229, %v240, %v242
    %v244 = vshll.u32 %v204, 8
    %v245 = vmul.u32.u64.compose %v244, %v243
    %v246 = vextract.low.u32 %v245
    %v247 = vextract.high.u32 %v245
    %v248 = vmul.u32.u64.compose %v244, %v239
    %v249 = vextract.low.u32 %v248
    %v250 = vextract.high.u32 %v248
    %v251 = vmul.u32 %v244, %v235
    %v252 = vadd.s32 %v247, %v249
    %vm253 = vc.u32 %v247, %v249
    %v254 = vadd.s32 %v250, 1
    %v255 = vsel %vm253, %v254, %v250
    %v256 = vadd.s32 %v251, %v255
    %v257 = vadd.s32 %v256, 536870912
    %v258 = vshrl.u32 %v257, 30
    %v259 = vshll.u32 %v258, 30
    %v260 = vsub.s32 %v256, %v259
    %vm261 = vcmp.lt.s32.totalorder %v260, 0
    %v262 = vsub.s32 0, %v260
    %v263 = vsel %vm261, %v262, %v260
    %v264 = vclz %v263
    %v265 = vsub.s32 %v264, 2
    %vm266 = vcmp.gt.s32.totalorder 0, %v265
    %v267 = vsel %vm266, 0, %v265
    %v268 = vsub.s32 32, %v267
    %v269 = vshll.u32 %v260, %v267
    %v270 = vshrl.u32 %v252, %v268
    %v271 = vor.u32 %v269, %v270
    %v272 = vsub.s32 4294967266, %v267
    %v273 = vadd.s32 %v272, 127
    %v274 = vshll.u32 %v273, 23
    %v275 = vor.u32 4788187, %v274
    %v276 = vand.u32 2147483647, %v275
    %v278 = vcvt.s32.f32 %v271
    %v279 = vmul.f32 %v278, %v276
    %v280 = vxor.u32 %v279, 2147483648
    %v281 = vsel %vm198, %v280, %v279
    %v282 = vsub.s32 4, %v258
    %v283 = vsel %vm198, %v282, %v258
    %v284 = vsel %vm197, %v91, %v281
    %v285 = vsel %vm197, 0, %v283
    %v286 = vcosq.f32.pop %v284
    %v287 = vsinq.f32.pop %v284
    %vm288 = vweird.f32 %v91
    %v289 = vadd.s32 %v285, 3
    %v290 = vand.u32 %v289, 3
    %vm291 = vcmp.lt.s32.totalorder %v290, 2
    %vm292 = vcmp.eq.s32.totalorder %v290, 0
    %v293 = vxor.u32 %v287, 2147483648
    %v294 = vsel %vm292, %v286, %v293
    %vm295 = vcmp.eq.s32.totalorder %v290, 2
    %v296 = vxor.u32 %v286, 2147483648
    %v297 = vsel %vm295, %v296, %v287
    %v298 = vsel %vm291, %v294, %v297
    %v299 = vsel %vm288, nan, %v298
    %v300 = vpack.c.bf16 %v299, %v195
    %v301 = vld [vmem:[%s2] sm:$0xf]
    %v302 = vld [vmem:[%s2 + $0x4] sm:$0xf]
    %v303 = vld [vmem:[%s2 + $0x8] sm:$0xf]
    %v304 = vld [vmem:[%s2 + $0xc] sm:$0xf]
    %v305 = vld [vmem:[%s2 + $0x10] sm:$0xf]
    %v306 = vld [vmem:[%s2 + $0x14] sm:$0xf]
    %v307 = vld [vmem:[%s2 + $0x18] sm:$0xf]
    %v308 = vld [vmem:[%s2 + $0x1c] sm:$0xf]
    %v317 = vunpack.c.l.b16 %v301
    %v318 = vunpack.c.l.b16 %v302
    %v319 = vunpack.c.l.b16 %v303
    %v320 = vunpack.c.l.b16 %v304
    %v321 = vunpack.c.l.b16 %v305
    %v322 = vunpack.c.l.b16 %v306
    %v323 = vunpack.c.l.b16 %v307
    %v324 = vunpack.c.l.b16 %v308
    %v325 = vpack.c.b16 %v318, %v317
    %v326 = vpack.c.b16 %v320, %v319
    %v327 = vpack.c.b16 %v322, %v321
    %v328 = vpack.c.b16 %v324, %v323
    %vm333 = vcmask 523264
    %v335 = vsel %vm333, %v300, 0
    %337 = vmatprep.subr.bf16.mxu0 0
    %338 = vmatpush1.bf16.msra.mxu0 0
    %339 = vmatprep.subr.bf16.mxu0 0
    %340 = vmatpush1.bf16.msra.mxu0 0
    %341 = vmatprep.subr.bf16.mxu0 0
    %342 = vmatpush1.bf16.msra.mxu0 0
    %343 = vmatprep.subr.bf16.mxu0 0
    %344 = vmatpush1.bf16.msra.mxu0 0
    %345 = vmatprep.subr.bf16.mxu0 0
    %346 = vmatpush1.bf16.msra.mxu0 %v328
    %347 = vmatprep.subr.bf16.mxu0 0
    %348 = vmatpush1.bf16.msra.mxu0 %v327
    %349 = vmatprep.subr.bf16.mxu0 0
    %350 = vmatpush1.bf16.msra.mxu0 %v326
    %351 = vmatprep.subr.bf16.mxu0 0
    %352 = vmatpush1.bf16.msra.mxu0 %v325
    %353 = vmatprep.subr.bf16.mxu0 0
    %354 = vmatpush2.bf16.msra.mxu0 0
    %355 = vmatprep.subr.bf16.mxu0 0
    %356 = vmatpush2.bf16.msra.mxu0 0
    %357 = vmatprep.subr.bf16.mxu0 0
    %358 = vmatpush2.bf16.msra.mxu0 0
    %359 = vmatprep.subr.bf16.mxu0 0
    %360 = vmatpush2.bf16.msra.mxu0 0
    %361 = vmatprep.subr.bf16.mxu0 0
    %362 = vmatpush2.bf16.msra.mxu0 0
    %363 = vmatprep.subr.bf16.mxu0 0
    %364 = vmatpush2.bf16.msra.mxu0 0
    %365 = vmatprep.subr.bf16.mxu0 0
    %366 = vmatpush2.bf16.msra.mxu0 0
    %367 = vmatprep.subr.bf16.mxu0 0
    %368 = vmatpush2.bf16.msra.mxu0 0
    %369 = vmatprep.mubr.bf16.mxu0 0
    %370 = vmatmul.mubr.bf16.gmra.mxu0 %v335
    %v371 = vpop.f32.mrf.mxu0
    %v372 = vadd.f32 0.0, %v371
    %v373 = vpop.f32.mrf.mxu0
    %v374 = vpop.f32.mrf.mxu0
    %v375 = vadd.f32 0.0, %v374
    %v376 = vpop.f32.mrf.mxu0
    %377 = vdwg.mxu0
    %v394 = vunpack.c.l.b16 %v44
    %v395 = vunpack.c.l.b16 %v45
    %v396 = vunpack.c.l.b16 %v46
    %v397 = vunpack.c.l.b16 %v47
    %v398 = vunpack.c.l.b16 %v48
    %v399 = vunpack.c.l.b16 %v49
    %v400 = vunpack.c.l.b16 %v50
    %v401 = vunpack.c.l.b16 %v51
    %v402 = vunpack.c.l.b16 %v52
    %v403 = vunpack.c.l.b16 %v53
    %v404 = vunpack.c.l.b16 %v54
    %v405 = vunpack.c.l.b16 %v55
    %v406 = vunpack.c.l.b16 %v56
    %v407 = vunpack.c.l.b16 %v57
    %v408 = vunpack.c.l.b16 %v58
    %v409 = vunpack.c.l.b16 %v59
    %v410 = vpack.c.b16 %v395, %v394
    %v411 = vpack.c.b16 %v397, %v396
    %v412 = vpack.c.b16 %v399, %v398
    %v413 = vpack.c.b16 %v401, %v400
    %v414 = vpack.c.b16 %v403, %v402
    %v415 = vpack.c.b16 %v405, %v404
    %v416 = vpack.c.b16 %v407, %v406
    %v417 = vpack.c.b16 %v409, %v408
    %426 = vmatprep.subr.bf16.mxu0 0
    %427 = vmatpush1.bf16.msra.mxu0 %v417
    %428 = vmatprep.subr.bf16.mxu0 0
    %429 = vmatpush1.bf16.msra.mxu0 %v416
    %430 = vmatprep.subr.bf16.mxu0 0
    %431 = vmatpush1.bf16.msra.mxu0 %v415
    %432 = vmatprep.subr.bf16.mxu0 0
    %433 = vmatpush1.bf16.msra.mxu0 %v414
    %434 = vmatprep.subr.bf16.mxu0 0
    %435 = vmatpush1.bf16.msra.mxu0 %v413
    %436 = vmatprep.subr.bf16.mxu0 0
    %437 = vmatpush1.bf16.msra.mxu0 %v412
    %438 = vmatprep.subr.bf16.mxu0 0
    %439 = vmatpush1.bf16.msra.mxu0 %v411
    %440 = vmatprep.subr.bf16.mxu0 0
    %441 = vmatpush1.bf16.msra.mxu0 %v410
    %442 = vmatprep.subr.bf16.mxu0 0
    %443 = vmatpush2.bf16.msra.mxu0 0
    %444 = vmatprep.subr.bf16.mxu0 0
    %445 = vmatpush2.bf16.msra.mxu0 0
    %446 = vmatprep.subr.bf16.mxu0 0
    %447 = vmatpush2.bf16.msra.mxu0 0
    %448 = vmatprep.subr.bf16.mxu0 0
    %449 = vmatpush2.bf16.msra.mxu0 0
    %450 = vmatprep.subr.bf16.mxu0 0
    %451 = vmatpush2.bf16.msra.mxu0 0
    %452 = vmatprep.subr.bf16.mxu0 0
    %453 = vmatpush2.bf16.msra.mxu0 0
    %454 = vmatprep.subr.bf16.mxu0 0
    %455 = vmatpush2.bf16.msra.mxu0 0
    %456 = vmatprep.subr.bf16.mxu0 0
    %457 = vmatpush2.bf16.msra.mxu0 0
    %458 = vmatprep.mubr.bf16.mxu0 0
    %459 = vmatmul.mubr.bf16.gmra.mxu0 %v43
    %v460 = vpop.f32.mrf.mxu0
    %v461 = vadd.f32 %v372, %v460
    %v462 = vpop.f32.mrf.mxu0
    %v463 = vpop.f32.mrf.mxu0
    %v464 = vadd.f32 %v375, %v463
    %v465 = vpop.f32.mrf.mxu0
    %466 = vdwg.mxu0
    %v467 = vld [vmem:[%s5] sm:$0x7]
    %v468 = vlaneseq
    %v469 = vshrl.u32 %v468, 7
    %v470 = vsub.s32 0, %v469
    %v471 = vrot.slane %v467, %v470
    %v472 = vadd.f32 %v461, %v471
    %v473 = vadd.f32 %v464, %v471
    %v474 = vtanh.pop %v472
    %v475 = vtanh.pop %v473
    %476 = vset.pattern.permute.xlu0 3
    %477 = vperm.xlu0 %476, %v25
    %v478 = vpop.permute.xlu0 %477
    %479 = vset.pattern.permute.xlu0 3
    %480 = vperm.xlu0 %479, %v26
    %v481 = vpop.permute.xlu0 %480
    %vm482 = vcmp.eq.s32.totalorder %v30, %v478
    %vm483 = vcmp.eq.s32.totalorder %v30, %v481
    %v484 = vadd.s32 %v25, 9
    %v485 = vadd.s32 %v26, 9
    %486 = vset.pattern.permute.xlu0 4
    %487 = vperm.xlu0 %486, %v484
    %v488 = vpop.permute.xlu0 %487
    %489 = vset.pattern.permute.xlu0 4
    %490 = vperm.xlu0 %489, %v485
    %v491 = vpop.permute.xlu0 %490
    %vm492 = vcmp.eq.s32.totalorder %v30, %v488
    %vm493 = vcmp.eq.s32.totalorder %v30, %v491
    %vm494 = vmor %vm482, %vm492
    %vm495 = vmor %vm483, %vm493
    %v496 = vadd.s32 %v25, 25
    %v497 = vadd.s32 %v26, 25
    %498 = vset.pattern.permute.xlu0 5
    %499 = vperm.xlu0 %498, %v496
    %v500 = vpop.permute.xlu0 %499
    %501 = vset.pattern.permute.xlu0 5
    %502 = vperm.xlu0 %501, %v497
    %v503 = vpop.permute.xlu0 %502
    %vm504 = vcmp.eq.s32.totalorder %v30, %v500
    %vm505 = vcmp.eq.s32.totalorder %v30, %v503
    %vm506 = vmor %vm494, %vm504
    %vm507 = vmor %vm495, %vm505
    %v508 = vsel %vm506, 1, 0
    %v509 = vsel %vm507, 1, 0
    %v510 = vcvt.s32.f32 %v508
    %v511 = vcvt.s32.f32 %v509
    %v512 = vpack.c.bf16 %v511, %v510
    %v513 = vld [vmem:[%s4] sm:$0xf]
    %v514 = vld [vmem:[%s4 + $0x4] sm:$0xf]
    %v515 = vld [vmem:[%s4 + $0x8] sm:$0xf]
    %v516 = vld [vmem:[%s4 + $0xc] sm:$0xf]
    %v521 = vunpack.c.l.b16 %v513
    %v522 = vunpack.c.l.b16 %v514
    %v523 = vunpack.c.l.b16 %v515
    %v524 = vunpack.c.l.b16 %v516
    %v525 = vpack.c.b16 %v522, %v521
    %v526 = vpack.c.b16 %v524, %v523
    %vm529 = vcmask 261120
    %v531 = vsel %vm529, %v512, 0
    %533 = vmatprep.subr.bf16.mxu0 0
    %534 = vmatpush1.bf16.msra.mxu0 0
    %535 = vmatprep.subr.bf16.mxu0 0
    %536 = vmatpush1.bf16.msra.mxu0 0
    %537 = vmatprep.subr.bf16.mxu0 0
    %538 = vmatpush1.bf16.msra.mxu0 0
    %539 = vmatprep.subr.bf16.mxu0 0
    %540 = vmatpush1.bf16.msra.mxu0 0
    %541 = vmatprep.subr.bf16.mxu0 0
    %542 = vmatpush1.bf16.msra.mxu0 0
    %543 = vmatprep.subr.bf16.mxu0 0
    %544 = vmatpush1.bf16.msra.mxu0 0
    %545 = vmatprep.subr.bf16.mxu0 0
    %546 = vmatpush1.bf16.msra.mxu0 %v526
    %547 = vmatprep.subr.bf16.mxu0 0
    %548 = vmatpush1.bf16.msra.mxu0 %v525
    %549 = vmatprep.subr.bf16.mxu0 0
    %550 = vmatpush2.bf16.msra.mxu0 0
    %551 = vmatprep.subr.bf16.mxu0 0
    %552 = vmatpush2.bf16.msra.mxu0 0
    %553 = vmatprep.subr.bf16.mxu0 0
    %554 = vmatpush2.bf16.msra.mxu0 0
    %555 = vmatprep.subr.bf16.mxu0 0
    %556 = vmatpush2.bf16.msra.mxu0 0
    %557 = vmatprep.subr.bf16.mxu0 0
    %558 = vmatpush2.bf16.msra.mxu0 0
    %559 = vmatprep.subr.bf16.mxu0 0
    %560 = vmatpush2.bf16.msra.mxu0 0
    %561 = vmatprep.subr.bf16.mxu0 0
    %562 = vmatpush2.bf16.msra.mxu0 0
    %563 = vmatprep.subr.bf16.mxu0 0
    %564 = vmatpush2.bf16.msra.mxu0 0
    %565 = vmatprep.mubr.bf16.mxu0 0
    %566 = vmatmul.mubr.bf16.gmra.mxu0 %v531
    %v567 = vpop.f32.mrf.mxu0
    %v568 = vadd.f32 0.0, %v567
    %v569 = vpop.f32.mrf.mxu0
    %v570 = vpop.f32.mrf.mxu0
    %v571 = vadd.f32 0.0, %v570
    %v572 = vpop.f32.mrf.mxu0
    %573 = vdwg.mxu0
    %v574 = vadd.f32 %v474, %v568
    %v575 = vadd.f32 %v475, %v571
    %576 = vadd.xlane.f32.xlu0 %v574
    %v577 = vpop.xlane.xlu0 %576
    %578 = vadd.xlane.f32.xlu0 %v575
    %v579 = vpop.xlane.xlu0 %578
    %v580 = vrcp.pop 128.0
    %v581 = vmul.f32 %v577, %v580
    %v582 = vmul.f32 %v579, %v580
    %v583 = vsub.f32 %v574, %v581
    %v584 = vsub.f32 %v575, %v582
    %v585 = vmul.f32 %v583, %v583
    %v586 = vmul.f32 %v584, %v584
    %587 = vadd.xlane.f32.xlu0 %v585
    %v588 = vpop.xlane.xlu0 %587
    %589 = vadd.xlane.f32.xlu0 %v586
    %v590 = vpop.xlane.xlu0 %589
    %v591 = vmul.f32 %v588, %v580
    %v592 = vmul.f32 %v590, %v580
    %v593 = vadd.f32 %v591, 1e-12
    %v594 = vadd.f32 %v592, 1e-12
    %v595 = vrsqrt.pop %v593
    %v596 = vrsqrt.pop %v594
    %v597 = vmul.f32 %v583, %v595
    %v598 = vmul.f32 %v584, %v596
    %v599 = vlaneseq
    %v600 = vshrl.u32 %v599, 7
    %v601 = vsub.s32 1, %v600
    %v602 = vrot.slane %v467, %v601
    %v603 = vmul.f32 %v597, %v602
    %v604 = vmul.f32 %v598, %v602
    %v605 = vlaneseq
    %v606 = vshrl.u32 %v605, 7
    %v607 = vsub.s32 2, %v606
    %v608 = vrot.slane %v467, %v607
    %v609 = vadd.f32 %v603, %v608
    %v610 = vadd.f32 %v604, %v608
    %611 = vst [vmem:[#allocation2] sm:$0xff] %v609
    %612 = vst [vmem:[#allocation2 + $0x8] sm:$0xff] %v610
    // Predicated region
    $region26: #{cehr_embeddings_forward.1} parent=1 // pred_check
      _
    $region27: #{cehr_embeddings_forward.1} parent=1 // pred_check_branch
      %614 = sbr.rel (0) target = $region29
    $region28: #{cehr_embeddings_forward.1} parent=1 // pred_region
      %s616 = ssub.s32 256, 256
      %617 = vsyncadd [#allocation3], %s616
      %s618 = sshll.u32 [#allocation2], 4
      %s619 = int_to_ptr.vmem [resolvable:$true] %s618
      %624 = dma.vmem_to_hbm [thread:$0]  %s619, 256, %s6, [#allocation3], 128, 128, 8
    $region29: #{cehr_embeddings_forward.1} parent=1 // pred_fallthru
      _
    // Predicated region
    $region30: #{cehr_embeddings_forward.1} parent=1 // pred_check
      _
    $region31: #{cehr_embeddings_forward.1} parent=1 // pred_check_branch
      %626 = sbr.rel (0) target = $region33
    $region32: #{cehr_embeddings_forward.1} parent=1 // pred_region
      %627 = dma.done [#allocation3], 256
    $region33: #{cehr_embeddings_forward.1} parent=1 // pred_fallthru
      _
    %628 = vsyncpa [#allocation3], 1

</llo_original>
